<compile_context>
chip_gen: v7x
topology: tpu7x:2x2x1
jax: 0.10.0
libtpu: 0.0.40
codegen_flags: <defaults>
</compile_context>

<pallas_src>
import jax
import jax.numpy as jnp
from jax.experimental import pallas as pl
from jax.experimental.pallas import tpu as pltpu


def _dma_copy_kernel(x_hbm_ref, o_hbm_ref, sem):
    # Single HBM -> HBM DMA of the full array: no VMEM staging, no vector
    # load/store traffic.  The DMA engine handles arbitrary shapes/dtypes, so
    # no (8, 128) alignment, reshaping, or padding is required.
    cp = pltpu.make_async_copy(x_hbm_ref, o_hbm_ref, sem)
    cp.start()
    cp.wait()


def _pallas_hbm_copy(x):
    """Identity copy via a single HBM->HBM async DMA (no VMEM round trip)."""
    itemsize = jnp.dtype(x.dtype).itemsize
    return pl.pallas_call(
        _dma_copy_kernel,
        out_shape=jax.ShapeDtypeStruct(x.shape, x.dtype),
        in_specs=[pl.BlockSpec(memory_space=pl.ANY)],
        out_specs=pl.BlockSpec(memory_space=pl.ANY),
        scratch_shapes=[pltpu.SemaphoreType.DMA],
        cost_estimate=pl.CostEstimate(
            flops=0,
            transcendentals=0,
            bytes_accessed=2 * x.size * itemsize,
        ),
    )(x)


def generator_forward(x, *, force_kernel=False):
    """Pallas implementation of Generator.forward.

    The reference forward is the identity (`return x`), so the default path
    performs zero data movement — that is the optimal implementation on every
    chip.  `force_kernel=True` routes through a Pallas kernel that does one
    direct HBM->HBM DMA copy, for on-device API parity / validation.
    """
    if not force_kernel:
        return x
    return _pallas_hbm_copy(x)


class GeneratorPallas:
    """Mirror of the PyTorch Generator module (identity forward, no params)."""

    def __init__(self, noise_dim, output_channels=3):
        self.noise_dim = noise_dim
        self.output_channels = output_channels
        # No parameters: the reference __init__ defines no layers.

    def __call__(self, x, *, force_kernel=False):
        return generator_forward(x, force_kernel=force_kernel)


if __name__ == "__main__":
    key = jax.random.PRNGKey(0)
    k_noise, k_img = jax.random.split(key)

    # Small shapes consistent with a GAN generator's inputs.
    batch, noise_dim = 2, 32
    x = jax.random.normal(k_noise, (batch, noise_dim), dtype=jnp.float32)

    gen = GeneratorPallas(noise_dim=noise_dim, output_channels=3)

    # Default path: identity with zero HBM traffic (exactly `return x`).
    out = jax.block_until_ready(gen(x))
    assert out.shape == x.shape and out.dtype == x.dtype
    assert bool(jnp.all(out == x))

    # Kernel path: single HBM->HBM DMA, no VMEM staging, no tiling.
    out_k = jax.block_until_ready(gen(x, force_kernel=True))
    assert out_k.shape == x.shape and out_k.dtype == x.dtype
    assert bool(jnp.all(out_k == x))

    # Also exercise a 4-D, non-128-aligned tensor — the DMA path needs no
    # reshape/pad fallback at all.
    x_img = jax.random.normal(k_img, (2, 4, 16, 16), dtype=jnp.float32)
    out_img = jax.block_until_ready(gen(x_img, force_kernel=True))
    assert out_img.shape == x_img.shape and out_img.dtype == x_img.dtype
    assert bool(jnp.all(out_img == x_img))

    print("KERNEL_OK")
</pallas_src>

<mosaic_0001>
module attributes {stable_mosaic.version = 11 : i64} {
  func.func @_dma_copy_kernel(%arg0: memref<2x32xf32, #tpu.memory_space<any>>, %arg1: memref<2x32xf32, #tpu.memory_space<any>>, %arg2: memref<!tpu.dma_semaphore, #tpu.memory_space<semaphore_mem>>) attributes {dimension_semantics = [], scalar_prefetch = 0 : i64, scratch_operands = 1 : i64, tpu.core_type = #tpu.core_type<tc>} {
    tpu.enqueue_dma source(%arg0 : memref<2x32xf32, #tpu.memory_space<any>>) target(%arg1 : memref<2x32xf32, #tpu.memory_space<any>>) target_semaphore(%arg2 : memref<!tpu.dma_semaphore, #tpu.memory_space<semaphore_mem>>)
    tpu.wait_dma2 semaphore(%arg2 : memref<!tpu.dma_semaphore, #tpu.memory_space<semaphore_mem>>) src(%arg0 : memref<2x32xf32, #tpu.memory_space<any>>) dst(%arg1 : memref<2x32xf32, #tpu.memory_space<any>>)
    return
  }
}

</mosaic_0001>

<llo_original>
// kernel: tpu_custom_call.1
$region0: #{tpu_custom_call.1}
  #allocation0 [shape = 'u32[]', space=smem, size = 0x4, offset = 0x4, fixed_abs, tag = 'smem constant byte address 0x4 - core index']
  #allocation1 [shape = 'u32[144,128]{1,0:T(1,128)}', space=vmem, size = 0x12000, scoped, tag = 'internal scratch']
  #allocation2 [shape = 's32[1]{0}', space=sflag, size = 0x4, scoped, tag = 'scratch operand']
  #allocation3 [shape = 's32[]', space=sflag, size = 0x4, offset = 0, fixed_abs, tag = 'sflag constant byte address 0x0 - dummy sync flag']
  #allocation4 [shape = 'u32[0]{0}', space=smem, size = 0, offset = 0, fixed_abs, tag = 'smem constant byte address 0x0 - null']
  %s0 = inlined_call_operand.hbm [shape: f32[2,32], index: 0, kind: input, shape index: {}]
  %s1 = inlined_call_operand.hbm [shape: f32[2,32], index: 1, kind: output, shape index: {}]
  %s2 = sld [smem:[#allocation0]]
  $region2: #{tpu_custom_call.1} parent=0
    _
  %s4 = ssub.s32 1, %s2
  %s5 = scalar_select 0, %s4, %s2
  %s7 = sshll.u32 1, 14
  %s8 = sxor.u32 4294967295, %s7
  %s11 = sshll.u32 3, 24
  %s12 = sxor.u32 4294967295, %s11
  %s13 = sand.u32 0, %s12
  %s15 = sor.u32 %s13, 0
  %18 = dma.general %s0, 32, %s1, [#allocation2], [#allocation3], [#allocation4], %s15, 0
  %s19 = smul.u32 2, 1
  %s20 = sshll.u32 %s19, 4
  %21 = dma.done [#allocation2], %s20
  %22 = vsyncmov [#allocation2]
  %s23 = vpop.sfrf %22
  %p24 = scmp.eq.s32.totalorder %s23, 0
  %p25 = pneg %p24
  %27 = shalt.err (%p25)

</llo_original>
